<compile_context>
chip_gen: v6e
topology: v6e:2x2x1
jax: 0.10.0
libtpu: 0.0.40
codegen_flags: <defaults>
</compile_context>

<pallas_src>
import functools

import jax
import jax.numpy as jnp
from jax.experimental import pallas as pl
from jax.experimental.pallas import tpu as pltpu

LANE = 128      # lane width: feature dims padded to multiples of this
TM_PREF = 256   # preferred destination-row tile (output / "parallel" axis)
TK_PREF = 512   # preferred source-row (reduction) tile


def _round_up(n, m):
    return ((n + m - 1) // m) * m


def _pad2d(a, rows, cols):
    r, c = a.shape
    return jnp.pad(a, ((0, rows - r), (0, cols - c)))


def _row_pad(n):
    """Pad a node count so the preferred tiles divide it (tiny graphs -> 128/256)."""
    if n > 2 * LANE:
        return _round_up(n, TK_PREF)
    return _round_up(n, LANE)


def _pick_tm(dp):
    """Destination-row tile: prefer TM_PREF; keep >=2 D-tiles when the data allows."""
    if dp >= 2 * TM_PREF:
        return TM_PREF
    if dp >= 2 * LANE:
        return LANE
    return dp                      # single 128-row tile (toy graphs)


def _vmem_limit_bytes():
    """~3/4 of physical VMEM: ~48 MiB on v7x (64 MiB phys), 96 MiB on v5e/v6e (128 MiB)."""
    phys = 64 * 1024 * 1024
    try:
        info = pltpu.get_tpu_info()
        if getattr(info, "vmem_capacity_bytes", 0):
            phys = int(info.vmem_capacity_bytes)
    except Exception:
        pass
    return min(96 * 1024 * 1024, (phys * 3) // 4)


# ----------------------------------------------------------------------------
# Kernel 1: per-layer source pre-projection  XW = X @ W_l   (row-tiled)
# ----------------------------------------------------------------------------
def _project_kernel(x_ref, w_ref, o_ref):
    o_ref[...] = jnp.dot(x_ref[...], w_ref[...],
                         preferred_element_type=jnp.float32).astype(o_ref.dtype)


def project_sources(x_pad, w_l):
    """[Rx, Cin_p] bf16 @ [Cin_p, Cout_p] bf16 -> [Rx, Cout_p] bf16."""
    rx, c_in = x_pad.shape
    c_out = w_l.shape[1]
    tr = min(TK_PREF, rx)          # divides rx by construction of _row_pad
    # TODO(synk): tile the Cin reduction too if Cin_p grows beyond a few K.
    return pl.pallas_call(
        _project_kernel,
        out_shape=jax.ShapeDtypeStruct((rx, c_out), jnp.bfloat16),
        grid=(rx // tr,),
        in_specs=[
            pl.BlockSpec((tr, c_in), lambda r: (r, 0)),
            pl.BlockSpec((c_in, c_out), lambda r: (0, 0)),     # resident weight
        ],
        out_specs=pl.BlockSpec((tr, c_out), lambda r: (r, 0)),
        compiler_params=pltpu.CompilerParams(
            dimension_semantics=("parallel",),
            vmem_limit_bytes=_vmem_limit_bytes(),
        ),
    )(x_pad, w_l)


# ----------------------------------------------------------------------------
# Kernel 2: fused mean-aggregation (A @ XW) + root term + bias + epilogue
# ----------------------------------------------------------------------------
def _sage_agg_kernel(a_ref, xw_ref, xt_ref, wr_ref, bl_ref, inv_ref, o_ref,
                     acc_ref, *, mode, valid_cols):
    """Grid = (D/tm, S/tk); the second (S) axis is the reduction over sources.

    a_ref   [tm, tk]        int8  edge-count tile of the dense adjacency
    xw_ref  [tk, Cout_p]    bf16  pre-projected source features (X @ W_l)
    xt_ref  [tm, Cin_p]     bf16  root/target features (D-tiled view of x)
    wr_ref  [Cin_p, Cout_p] bf16  root weight (resident)
    bl_ref  [1, Cout_p]     f32   bias (resident)
    inv_ref [tm, 1]         f32   exact 1/deg per destination row
    o_ref   [tm, Cout_p]    bf16 hidden layers / f32 last layer
    acc_ref [tm, Cout_p]    f32   VMEM scratch (sum over in-edges of XW rows)
    """
    k = pl.program_id(1)

    @pl.when(k == 0)
    def _():
        acc_ref[...] = jnp.zeros_like(acc_ref)

    # int8 counts -> bf16 for the MXU; f32 accumulation.
    a = a_ref[...].astype(jnp.bfloat16)
    acc_ref[...] += jnp.dot(a, xw_ref[...], preferred_element_type=jnp.float32)

    @pl.when(k == pl.num_programs(1) - 1)
    def _():
        out = acc_ref[...] * inv_ref[...]                  # exact f32 mean
        out = out + jnp.dot(xt_ref[...], wr_ref[...],
                            preferred_element_type=jnp.float32)
        out = out + bl_ref[...]
        if mode == "relu":
            out = jnp.maximum(out, 0.0)
        elif mode == "log_softmax":
            if valid_cols < out.shape[-1]:                 # compile-time skip
                col = jax.lax.broadcasted_iota(jnp.int32, out.shape, 1)
                out = jnp.where(col < valid_cols, out, -1e30)
            m = jnp.max(out, axis=-1, keepdims=True)
            lse = jnp.log(jnp.sum(jnp.exp(out - m), axis=-1, keepdims=True)) + m
            out = out - lse
        o_ref[...] = out.astype(o_ref.dtype)


def sage_layer(a_cnt, xw, x_pad, w_r, b_l, inv_deg, *, tm, mode, valid_cols,
               out_dtype):
    """a_cnt [Dp, Rx] int8, xw [Rx, Cout_p] bf16, x_pad [Rx, Cin_p] bf16,
       w_r [Cin_p, Cout_p] bf16, b_l [1, Cout_p] f32, inv_deg [Dp, 1] f32
       -> [Dp, Cout_p]."""
    dp, rx = a_cnt.shape
    c_in = x_pad.shape[1]
    c_out = xw.shape[1]
    tk = min(TK_PREF, rx)          # divides rx by construction of _row_pad
    grid = (dp // tm, rx // tk)
    kernel = functools.partial(_sage_agg_kernel, mode=mode, valid_cols=valid_cols)
    return pl.pallas_call(
        kernel,
        out_shape=jax.ShapeDtypeStruct((dp, c_out), out_dtype),
        grid=grid,
        in_specs=[
            pl.BlockSpec((tm, tk), lambda i, k: (i, k)),        # A counts (int8)
            pl.BlockSpec((tk, c_out), lambda i, k: (k, 0)),     # X @ W_l, S-tiled
            pl.BlockSpec((tm, c_in), lambda i, k: (i, 0)),      # x targets, D-tiled
            pl.BlockSpec((c_in, c_out), lambda i, k: (0, 0)),   # W_r (resident)
            pl.BlockSpec((1, c_out), lambda i, k: (0, 0)),      # b_l (resident)
            pl.BlockSpec((tm, 1), lambda i, k: (i, 0)),         # exact f32 1/deg
        ],
        out_specs=pl.BlockSpec((tm, c_out), lambda i, k: (i, 0)),
        scratch_shapes=[pltpu.VMEM((tm, c_out), jnp.float32)],
        compiler_params=pltpu.CompilerParams(
            dimension_semantics=("parallel", "arbitrary"),
            vmem_limit_bytes=_vmem_limit_bytes(),
        ),
    )(a_cnt, xw, x_pad, w_r, b_l, inv_deg)


# ----------------------------------------------------------------------------
# JAX glue: int8 adjacency counts, exact 1/deg, padding, layer chaining, params
# ----------------------------------------------------------------------------
def build_adj_int8_and_invdeg(edge_index, dp, rx):
    """Dense edge-count matrix built directly at padded size in int8, plus an
    exact f32 1/deg column.  Duplicate edges count with multiplicity (matches
    PyG mean aggregation over messages); isolated rows get inv_deg = 1."""
    src, dst = edge_index
    ones_i8 = jnp.ones(src.shape, jnp.int8)
    a = jnp.zeros((dp, rx), jnp.int8).at[dst, src].add(ones_i8)
    deg = jnp.zeros((dp,), jnp.float32).at[dst].add(1.0)
    inv_deg = (1.0 / jnp.maximum(deg, 1.0)).reshape(dp, 1)
    return a, inv_deg


def sage_forward(x, adjs, params, out_channels):
    """x [num_src0, in_channels] f32.
       adjs: list of (edge_index=(src, dst), num_src, num_dst) per layer.
       params: list of (w_l [Cin,Cout], b_l [Cout], w_r [Cin,Cout]) f32, unpadded."""
    num_layers = len(params)

    # Pad + cast the input features once (rows/cols tile-aligned).
    rx0 = _row_pad(adjs[0][1])
    cin0 = _round_up(x.shape[1], LANE)
    x_pad = _pad2d(x, rx0, cin0).astype(jnp.bfloat16)

    for i, (edge_index, num_src, num_dst) in enumerate(adjs):
        w_l, b_l, w_r = params[i]
        c_in, c_out = w_l.shape
        cin_p = _round_up(c_in, LANE)
        cout_p = _round_up(c_out, LANE)
        rx = x_pad.shape[0]
        assert cin_p == x_pad.shape[1]
        assert num_dst <= num_src <= rx   # x_target = x[:num_dst]

        dp = _row_pad(num_dst)
        tm = _pick_tm(dp)

        a_cnt, inv_deg = build_adj_int8_and_invdeg(edge_index, dp, rx)

        wl_p = _pad2d(w_l, cin_p, cout_p).astype(jnp.bfloat16)
        wr_p = _pad2d(w_r, cin_p, cout_p).astype(jnp.bfloat16)
        bl_p = _pad2d(b_l.reshape(1, -1), 1, cout_p).astype(jnp.float32)

        # Pre-project every source row with W_l once per layer; the aggregation
        # then carries Cout_p columns instead of Cin_p.
        xw = project_sources(x_pad, wl_p)

        last = (i == num_layers - 1)
        x_pad = sage_layer(
            a_cnt, xw, x_pad, wr_p, bl_p, inv_deg,
            tm=tm,
            mode="log_softmax" if last else "relu",
            valid_cols=c_out,
            out_dtype=jnp.float32 if last else jnp.bfloat16,
        )

    num_dst_last = adjs[-1][2]
    return x_pad[:num_dst_last, :out_channels]


def init_sage_params(key, in_channels, hidden_channels, out_channels, num_layers):
    dims = [in_channels] + [hidden_channels] * (num_layers - 1) + [out_channels]
    params = []
    for i in range(num_layers):
        c_in, c_out = dims[i], dims[i + 1]
        key, k1, k2 = jax.random.split(key, 3)
        scale = (6.0 / (c_in + c_out)) ** 0.5
        w_l = jax.random.uniform(k1, (c_in, c_out), jnp.float32, -scale, scale)
        w_r = jax.random.uniform(k2, (c_in, c_out), jnp.float32, -scale, scale)
        b_l = jnp.zeros((c_out,), jnp.float32)
        params.append((w_l, b_l, w_r))
    return params


def _dense_norm_adj_f32(edge_index, num_src, num_dst):
    src, dst = edge_index
    a = jnp.zeros((num_dst, num_src), jnp.float32).at[dst, src].add(1.0)
    deg = jnp.sum(a, axis=1, keepdims=True)
    return a / jnp.maximum(deg, 1.0)


def sage_reference(x, adjs, params):
    """Pure-JAX f32 reference of the same forward pass (sanity check)."""
    h = x
    n = len(params)
    for i, (edge_index, num_src, num_dst) in enumerate(adjs):
        w_l, b_l, w_r = params[i]
        a = _dense_norm_adj_f32(edge_index, num_src, num_dst)
        xt = h[:num_dst]
        out = a @ h @ w_l + b_l + xt @ w_r
        h = jnp.maximum(out, 0.0) if i != n - 1 else out
    return jax.nn.log_softmax(h, axis=-1)


# ----------------------------------------------------------------------------
# Main
# ----------------------------------------------------------------------------
if __name__ == "__main__":
    key = jax.random.PRNGKey(0)

    # Small synthetic neighbor-sampled graph (2-layer SAGE).
    in_channels, hidden_channels, out_channels = 16, 32, 8
    num_layers = 2
    layer_sizes = [(32, 16), (16, 8)]   # (num_src, num_dst) per sampled hop
    num_edges = 64

    key, kx = jax.random.split(key)
    x = jax.random.normal(kx, (layer_sizes[0][0], in_channels), jnp.float32)

    adjs = []
    for (num_src, num_dst) in layer_sizes:
        key, ks, kd = jax.random.split(key, 3)
        src = jax.random.randint(ks, (num_edges,), 0, num_src)
        dst = jax.random.randint(kd, (num_edges,), 0, num_dst)
        adjs.append(((src, dst), num_src, num_dst))

    key, kp = jax.random.split(key)
    params = init_sage_params(kp, in_channels, hidden_channels, out_channels,
                              num_layers)

    out = sage_forward(x, adjs, params, out_channels)
    out = jax.block_until_ready(out)

    # Sanity: shape, log_softmax rows sum to 1 in prob space, matches f32 ref
    # (loose tolerance: bf16 MXU inputs with f32 accumulation).
    assert out.shape == (layer_sizes[-1][1], out_channels)
    assert jnp.allclose(jnp.sum(jnp.exp(out), axis=-1), 1.0, atol=1e-4)
    ref = sage_reference(x, adjs, params)
    assert jnp.max(jnp.abs(out - ref)) < 0.1

    print("KERNEL_OK")
</pallas_src>

<mosaic_0001>
module attributes {stable_mosaic.version = 11 : i64} {
  func.func @_project_kernel(%arg0: i32, %arg1: memref<128x128xbf16, #tpu.memory_space<vmem>>, %arg2: memref<128x128xbf16, #tpu.memory_space<vmem>>, %arg3: memref<128x128xbf16, #tpu.memory_space<vmem>>) attributes {dimension_semantics = [#tpu.dimension_semantics<parallel>], iteration_bounds = array<i64: 1>, scalar_prefetch = 0 : i64, scratch_operands = 0 : i64, tpu.core_type = #tpu.core_type<tc>, window_params = [{transform_indices = @transform_0, window_bounds = array<i64: 128, 128>}, {pipeline_mode = #tpu.pipeline_mode<synchronous>, transform_indices = @transform_1, window_bounds = array<i64: 128, 128>}, {transform_indices = @transform_2, window_bounds = array<i64: 128, 128>}]} {
    %c0 = arith.constant 0 : index
    %c0_0 = arith.constant 0 : index
    %0 = vector.load %arg1[%c0, %c0_0] : memref<128x128xbf16, #tpu.memory_space<vmem>>, vector<128x128xbf16>
    %c0_1 = arith.constant 0 : index
    %c0_2 = arith.constant 0 : index
    %1 = vector.load %arg2[%c0_1, %c0_2] : memref<128x128xbf16, #tpu.memory_space<vmem>>, vector<128x128xbf16>
    %cst = arith.constant dense<0.000000e+00> : vector<128x128xf32>
    %2 = tpu.matmul %0, %1, %cst {dimension_numbers = #tpu.dot_dimension_numbers<[1], [0], [0], [1], [0, 0, 1, 1], [], []>} : vector<128x128xbf16>, vector<128x128xbf16>, vector<128x128xf32> -> vector<128x128xf32>
    %3 = arith.truncf %2 : vector<128x128xf32> to vector<128x128xbf16>
    %c0_3 = arith.constant 0 : index
    %c0_4 = arith.constant 0 : index
    %4 = vector.load %arg3[%c0_3, %c0_4] : memref<128x128xbf16, #tpu.memory_space<vmem>>, vector<128x128xbf16>
    tpu.vector_store %arg3[%c0_3, %c0_4], %3 {strides = array<i32>} : memref<128x128xbf16, #tpu.memory_space<vmem>>, vector<128x128xbf16>,
    return
  }
  func.func @transform_0(%arg0: i32) -> (i32, i32) {
    %c0_i32 = arith.constant 0 : i32
    %c0_i32_0 = arith.constant 0 : i32
    return %arg0, %c0_i32 : i32, i32
  }
  func.func @transform_1(%arg0: i32) -> (i32, i32) {
    %c0_i32 = arith.constant 0 : i32
    %c0_i32_0 = arith.constant 0 : i32
    %c0_i32_1 = arith.constant 0 : i32
    return %c0_i32, %c0_i32_0 : i32, i32
  }
  func.func @transform_2(%arg0: i32) -> (i32, i32) {
    %c0_i32 = arith.constant 0 : i32
    %c0_i32_0 = arith.constant 0 : i32
    return %arg0, %c0_i32 : i32, i32
  }
}

</mosaic_0001>

<llo_original>
// kernel: tpu_custom_call.1
$region0: #{tpu_custom_call.1}
  #allocation0 [shape = 'u32[]', space=smem, size = 0x4, offset = 0x4, fixed_abs, tag = 'smem constant byte address 0x4 - core index']
  #allocation1 [shape = 'u32[144,128]{1,0:T(1,128)}', space=vmem, size = 0x12000, scoped, tag = 'internal scratch']
  %s0 = inlined_call_operand.hbm [shape: bf16[128,128], index: 0, kind: input, shape index: {}]
  %s1 = inlined_call_operand.hbm [shape: bf16[128,128], index: 1, kind: input, shape index: {}]
  %s2 = inlined_call_operand.hbm [shape: bf16[128,128], index: 2, kind: output, shape index: {}]
  %s3 = sld [smem:[#allocation0]]
  $region26: #{tpu_custom_call.1} parent=0
    _
  %s5 = ssub.s32 1, %s3
  %s6 = scalar_select 0, %s5, %s3
  $region1: #{tpu_custom_call.1} parent=0
    #allocation2 [shape = 'u8[32768]{0}', space=vmem, size = 0x8000, scoped, tag = 'input window, operand 0, single buffered']
    #allocation3 [shape = 's32[1]{0}', space=sflag, size = 0x4, scoped, tag = 'scoped memory for tpu_custom_call.1']
    #allocation4 [shape = 's32[1]{0}', space=sflag, size = 0x4, scoped, tag = 'scoped memory for tpu_custom_call.1']
    #allocation5 [shape = 'u8[32768]{0}', space=vmem, size = 0x8000, scoped, tag = 'input window, operand 1, single buffered']
    #allocation6 [shape = 's32[1]{0}', space=sflag, size = 0x4, scoped, tag = 'scoped memory for tpu_custom_call.1']
    #allocation7 [shape = 'u8[32768]{0}', space=vmem, size = 0x8000, scoped, tag = 'output window, operand 0, single buffered']
    %7 = vsyncpa [#allocation3], 0
    %8 = vsyncpa [#allocation6], 0
    %9 = vsyncpa [#allocation4], 0
    // Predicated region
    $region2: #{tpu_custom_call.1} parent=1 // pred_check
      _
    $region3: #{tpu_custom_call.1} parent=1 // pred_check_branch
      %11 = sbr.rel (0) target = $region5
    $region4: #{tpu_custom_call.1} parent=1 // pred_region
      %s13 = ssub.s32 1024, 1024
      %14 = vsyncadd [#allocation3], %s13
      %s15 = sshll.u32 [#allocation2], 4
      %s16 = int_to_ptr.vmem [resolvable:$true] %s15
      %21 = dma.hbm_to_vmem [thread:$0]  %s0, 1024, %s16, [#allocation3], 64, 64, 4
    $region5: #{tpu_custom_call.1} parent=1 // pred_fallthru
      _
    // Predicated region
    $region6: #{tpu_custom_call.1} parent=1 // pred_check
      _
    $region7: #{tpu_custom_call.1} parent=1 // pred_check_branch
      %23 = sbr.rel (0) target = $region9
    $region8: #{tpu_custom_call.1} parent=1 // pred_region
      %s25 = ssub.s32 1024, 1024
      %26 = vsyncadd [#allocation6], %s25
      %s27 = sshll.u32 [#allocation5], 4
      %s28 = int_to_ptr.vmem [resolvable:$true] %s27
      %33 = dma.hbm_to_vmem [thread:$0]  %s1, 1024, %s28, [#allocation6], 64, 64, 4
    $region9: #{tpu_custom_call.1} parent=1 // pred_fallthru
      _
    // Predicated region
    $region10: #{tpu_custom_call.1} parent=1 // pred_check
      _
    $region11: #{tpu_custom_call.1} parent=1 // pred_check_branch
      %35 = sbr.rel (0) target = $region13
    $region12: #{tpu_custom_call.1} parent=1 // pred_region
      %36 = dma.done [#allocation3], 1024
    $region13: #{tpu_custom_call.1} parent=1 // pred_fallthru
      _
    // Predicated region
    $region14: #{tpu_custom_call.1} parent=1 // pred_check
      _
    $region15: #{tpu_custom_call.1} parent=1 // pred_check_branch
      %38 = sbr.rel (0) target = $region17
    $region16: #{tpu_custom_call.1} parent=1 // pred_region
      %39 = dma.done [#allocation6], 1024
    $region17: #{tpu_custom_call.1} parent=1 // pred_fallthru
      _
    %v41 = vld [vmem:[#allocation2] sm:$0xf]
    %v42 = vld [vmem:[#allocation2 + $0x4] sm:$0xf]
    %v43 = vld [vmem:[#allocation2 + $0x8] sm:$0xf]
    %v44 = vld [vmem:[#allocation2 + $0xc] sm:$0xf]
    %v45 = vld [vmem:[#allocation2 + $0x10] sm:$0xf]
    %v46 = vld [vmem:[#allocation2 + $0x14] sm:$0xf]
    %v47 = vld [vmem:[#allocation2 + $0x18] sm:$0xf]
    %v48 = vld [vmem:[#allocation2 + $0x1c] sm:$0xf]
    %v49 = vld [vmem:[#allocation2 + $0x20] sm:$0xf]
    %v50 = vld [vmem:[#allocation2 + $0x24] sm:$0xf]
    %v51 = vld [vmem:[#allocation2 + $0x28] sm:$0xf]
    %v52 = vld [vmem:[#allocation2 + $0x2c] sm:$0xf]
    %v53 = vld [vmem:[#allocation2 + $0x30] sm:$0xf]
    %v54 = vld [vmem:[#allocation2 + $0x34] sm:$0xf]
    %v55 = vld [vmem:[#allocation2 + $0x38] sm:$0xf]
    %v56 = vld [vmem:[#allocation2 + $0x3c] sm:$0xf]
    %v57 = vld [vmem:[#allocation5] sm:$0xf]
    %v58 = vld [vmem:[#allocation5 + $0x4] sm:$0xf]
    %v59 = vld [vmem:[#allocation5 + $0x8] sm:$0xf]
    %v60 = vld [vmem:[#allocation5 + $0xc] sm:$0xf]
    %v61 = vld [vmem:[#allocation5 + $0x10] sm:$0xf]
    %v62 = vld [vmem:[#allocation5 + $0x14] sm:$0xf]
    %v63 = vld [vmem:[#allocation5 + $0x18] sm:$0xf]
    %v64 = vld [vmem:[#allocation5 + $0x1c] sm:$0xf]
    %v65 = vld [vmem:[#allocation5 + $0x20] sm:$0xf]
    %v66 = vld [vmem:[#allocation5 + $0x24] sm:$0xf]
    %v67 = vld [vmem:[#allocation5 + $0x28] sm:$0xf]
    %v68 = vld [vmem:[#allocation5 + $0x2c] sm:$0xf]
    %v69 = vld [vmem:[#allocation5 + $0x30] sm:$0xf]
    %v70 = vld [vmem:[#allocation5 + $0x34] sm:$0xf]
    %v71 = vld [vmem:[#allocation5 + $0x38] sm:$0xf]
    %v72 = vld [vmem:[#allocation5 + $0x3c] sm:$0xf]
    %v89 = vunpack.c.l.b16 %v41
    %v90 = vunpack.c.l.b16 %v42
    %v91 = vunpack.c.l.b16 %v43
    %v92 = vunpack.c.l.b16 %v44
    %v93 = vunpack.c.l.b16 %v45
    %v94 = vunpack.c.l.b16 %v46
    %v95 = vunpack.c.l.b16 %v47
    %v96 = vunpack.c.l.b16 %v48
    %v97 = vunpack.c.l.b16 %v49
    %v98 = vunpack.c.l.b16 %v50
    %v99 = vunpack.c.l.b16 %v51
    %v100 = vunpack.c.l.b16 %v52
    %v101 = vunpack.c.l.b16 %v53
    %v102 = vunpack.c.l.b16 %v54
    %v103 = vunpack.c.l.b16 %v55
    %v104 = vunpack.c.l.b16 %v56
    %v105 = vpack.c.b16 %v90, %v89
    %v106 = vpack.c.b16 %v92, %v91
    %v107 = vpack.c.b16 %v94, %v93
    %v108 = vpack.c.b16 %v96, %v95
    %v109 = vpack.c.b16 %v98, %v97
    %v110 = vpack.c.b16 %v100, %v99
    %v111 = vpack.c.b16 %v102, %v101
    %v112 = vpack.c.b16 %v104, %v103
    %v137 = vunpack.c.l.b16 %v57
    %v138 = vunpack.c.l.b16 %v58
    %v139 = vunpack.c.l.b16 %v59
    %v140 = vunpack.c.l.b16 %v60
    %v141 = vunpack.c.l.b16 %v61
    %v142 = vunpack.c.l.b16 %v62
    %v143 = vunpack.c.l.b16 %v63
    %v144 = vunpack.c.l.b16 %v64
    %v145 = vunpack.c.l.b16 %v65
    %v146 = vunpack.c.l.b16 %v66
    %v147 = vunpack.c.l.b16 %v67
    %v148 = vunpack.c.l.b16 %v68
    %v149 = vunpack.c.l.b16 %v69
    %v150 = vunpack.c.l.b16 %v70
    %v151 = vunpack.c.l.b16 %v71
    %v152 = vunpack.c.l.b16 %v72
    %v153 = vpack.c.b16 %v138, %v137
    %v154 = vpack.c.b16 %v140, %v139
    %v155 = vpack.c.b16 %v142, %v141
    %v156 = vpack.c.b16 %v144, %v143
    %v157 = vpack.c.b16 %v146, %v145
    %v158 = vpack.c.b16 %v148, %v147
    %v159 = vpack.c.b16 %v150, %v149
    %v160 = vpack.c.b16 %v152, %v151
    %169 = vmatprep.subr.bf16.mxu0 0
    %170 = vmatpush1.bf16.msra.mxu0 %v160
    %171 = vmatprep.subr.bf16.mxu0 0
    %172 = vmatpush1.bf16.msra.mxu0 %v159
    %173 = vmatprep.subr.bf16.mxu0 0
    %174 = vmatpush1.bf16.msra.mxu0 %v158
    %175 = vmatprep.subr.bf16.mxu0 0
    %176 = vmatpush1.bf16.msra.mxu0 %v157
    %177 = vmatprep.subr.bf16.mxu0 0
    %178 = vmatpush1.bf16.msra.mxu0 %v156
    %179 = vmatprep.subr.bf16.mxu0 0
    %180 = vmatpush1.bf16.msra.mxu0 %v155
    %181 = vmatprep.subr.bf16.mxu0 0
    %182 = vmatpush1.bf16.msra.mxu0 %v154
    %183 = vmatprep.subr.bf16.mxu0 0
    %184 = vmatpush1.bf16.msra.mxu0 %v153
    %185 = vmatprep.subr.bf16.mxu0 0
    %186 = vmatpush2.bf16.msra.mxu0 0
    %187 = vmatprep.subr.bf16.mxu0 0
    %188 = vmatpush2.bf16.msra.mxu0 0
    %189 = vmatprep.subr.bf16.mxu0 0
    %190 = vmatpush2.bf16.msra.mxu0 0
    %191 = vmatprep.subr.bf16.mxu0 0
    %192 = vmatpush2.bf16.msra.mxu0 0
    %193 = vmatprep.subr.bf16.mxu0 0
    %194 = vmatpush2.bf16.msra.mxu0 0
    %195 = vmatprep.subr.bf16.mxu0 0
    %196 = vmatpush2.bf16.msra.mxu0 0
    %197 = vmatprep.subr.bf16.mxu0 0
    %198 = vmatpush2.bf16.msra.mxu0 0
    %199 = vmatprep.subr.bf16.mxu0 0
    %200 = vmatpush2.bf16.msra.mxu0 0
    %201 = vmatprep.mubr.bf16.mxu0 0
    %202 = vmatmul.mubr.bf16.gmra.mxu0 %v105
    %v203 = vpop.f32.mrf.mxu0
    %v204 = vadd.f32 0.0, %v203
    %v205 = vpop.f32.mrf.mxu0
    %v206 = vpop.f32.mrf.mxu0
    %v207 = vadd.f32 0.0, %v206
    %v208 = vpop.f32.mrf.mxu0
    %209 = vmatprep.mubr.bf16.mxu0 0
    %210 = vmatmul.mubr.bf16.gmra.mxu0 %v106
    %v211 = vpop.f32.mrf.mxu0
    %v212 = vadd.f32 0.0, %v211
    %v213 = vpop.f32.mrf.mxu0
    %v214 = vpop.f32.mrf.mxu0
    %v215 = vadd.f32 0.0, %v214
    %v216 = vpop.f32.mrf.mxu0
    %217 = vmatprep.mubr.bf16.mxu0 0
    %218 = vmatmul.mubr.bf16.gmra.mxu0 %v107
    %v219 = vpop.f32.mrf.mxu0
    %v220 = vadd.f32 0.0, %v219
    %v221 = vpop.f32.mrf.mxu0
    %v222 = vpop.f32.mrf.mxu0
    %v223 = vadd.f32 0.0, %v222
    %v224 = vpop.f32.mrf.mxu0
    %225 = vmatprep.mubr.bf16.mxu0 0
    %226 = vmatmul.mubr.bf16.gmra.mxu0 %v108
    %v227 = vpop.f32.mrf.mxu0
    %v228 = vadd.f32 0.0, %v227
    %v229 = vpop.f32.mrf.mxu0
    %v230 = vpop.f32.mrf.mxu0
    %v231 = vadd.f32 0.0, %v230
    %v232 = vpop.f32.mrf.mxu0
    %233 = vmatprep.mubr.bf16.mxu0 0
    %234 = vmatmul.mubr.bf16.gmra.mxu0 %v109
    %v235 = vpop.f32.mrf.mxu0
    %v236 = vadd.f32 0.0, %v235
    %v237 = vpop.f32.mrf.mxu0
    %v238 = vpop.f32.mrf.mxu0
    %v239 = vadd.f32 0.0, %v238
    %v240 = vpop.f32.mrf.mxu0
    %241 = vmatprep.mubr.bf16.mxu0 0
    %242 = vmatmul.mubr.bf16.gmra.mxu0 %v110
    %v243 = vpop.f32.mrf.mxu0
    %v244 = vadd.f32 0.0, %v243
    %v245 = vpop.f32.mrf.mxu0
    %v246 = vpop.f32.mrf.mxu0
    %v247 = vadd.f32 0.0, %v246
    %v248 = vpop.f32.mrf.mxu0
    %249 = vmatprep.mubr.bf16.mxu0 0
    %250 = vmatmul.mubr.bf16.gmra.mxu0 %v111
    %v251 = vpop.f32.mrf.mxu0
    %v252 = vadd.f32 0.0, %v251
    %v253 = vpop.f32.mrf.mxu0
    %v254 = vpop.f32.mrf.mxu0
    %v255 = vadd.f32 0.0, %v254
    %v256 = vpop.f32.mrf.mxu0
    %257 = vmatprep.mubr.bf16.mxu0 0
    %258 = vmatmul.mubr.bf16.gmra.mxu0 %v112
    %v259 = vpop.f32.mrf.mxu0
    %v260 = vadd.f32 0.0, %v259
    %v261 = vpop.f32.mrf.mxu0
    %v262 = vpop.f32.mrf.mxu0
    %v263 = vadd.f32 0.0, %v262
    %v264 = vpop.f32.mrf.mxu0
    %265 = vdwg.mxu0
    %v266 = vpack.c.bf16 %v207, %v204
    %v267 = vpack.c.bf16 %v215, %v212
    %v268 = vpack.c.bf16 %v223, %v220
    %v269 = vpack.c.bf16 %v231, %v228
    %v270 = vpack.c.bf16 %v239, %v236
    %v271 = vpack.c.bf16 %v247, %v244
    %v272 = vpack.c.bf16 %v255, %v252
    %v273 = vpack.c.bf16 %v263, %v260
    %v282 = vunpack.c.l.b16 %v266
    %v283 = vunpack.c.h.b16 %v266
    %v284 = vunpack.c.l.b16 %v267
    %v285 = vunpack.c.h.b16 %v267
    %v286 = vunpack.c.l.b16 %v268
    %v287 = vunpack.c.h.b16 %v268
    %v288 = vunpack.c.l.b16 %v269
    %v289 = vunpack.c.h.b16 %v269
    %v290 = vunpack.c.l.b16 %v270
    %v291 = vunpack.c.h.b16 %v270
    %v292 = vunpack.c.l.b16 %v271
    %v293 = vunpack.c.h.b16 %v271
    %v294 = vunpack.c.l.b16 %v272
    %v295 = vunpack.c.h.b16 %v272
    %v296 = vunpack.c.l.b16 %v273
    %v297 = vunpack.c.h.b16 %v273
    %v298 = vpack.c.b16 %v282, %v282
    %v299 = vpack.c.b16 %v283, %v283
    %v300 = vpack.c.b16 %v284, %v284
    %v301 = vpack.c.b16 %v285, %v285
    %v302 = vpack.c.b16 %v286, %v286
    %v303 = vpack.c.b16 %v287, %v287
    %v304 = vpack.c.b16 %v288, %v288
    %v305 = vpack.c.b16 %v289, %v289
    %v306 = vpack.c.b16 %v290, %v290
    %v307 = vpack.c.b16 %v291, %v291
    %v308 = vpack.c.b16 %v292, %v292
    %v309 = vpack.c.b16 %v293, %v293
    %v310 = vpack.c.b16 %v294, %v294
    %v311 = vpack.c.b16 %v295, %v295
    %v312 = vpack.c.b16 %v296, %v296
    %v313 = vpack.c.b16 %v297, %v297
    %330 = vst [vmem:[#allocation7] sm:$0xf] %v298
    %331 = vst [vmem:[#allocation7 + $0x4] sm:$0xf] %v299
    %332 = vst [vmem:[#allocation7 + $0x8] sm:$0xf] %v300
    %333 = vst [vmem:[#allocation7 + $0xc] sm:$0xf] %v301
    %334 = vst [vmem:[#allocation7 + $0x10] sm:$0xf] %v302
    %335 = vst [vmem:[#allocation7 + $0x14] sm:$0xf] %v303
    %336 = vst [vmem:[#allocation7 + $0x18] sm:$0xf] %v304
    %337 = vst [vmem:[#allocation7 + $0x1c] sm:$0xf] %v305
    %338 = vst [vmem:[#allocation7 + $0x20] sm:$0xf] %v306
    %339 = vst [vmem:[#allocation7 + $0x24] sm:$0xf] %v307
    %340 = vst [vmem:[#allocation7 + $0x28] sm:$0xf] %v308
    %341 = vst [vmem:[#allocation7 + $0x2c] sm:$0xf] %v309
    %342 = vst [vmem:[#allocation7 + $0x30] sm:$0xf] %v310
    %343 = vst [vmem:[#allocation7 + $0x34] sm:$0xf] %v311
    %344 = vst [vmem:[#allocation7 + $0x38] sm:$0xf] %v312
    %345 = vst [vmem:[#allocation7 + $0x3c] sm:$0xf] %v313
    // Predicated region
    $region18: #{tpu_custom_call.1} parent=1 // pred_check
      _
    $region19: #{tpu_custom_call.1} parent=1 // pred_check_branch
      %347 = sbr.rel (0) target = $region21
    $region20: #{tpu_custom_call.1} parent=1 // pred_region
      %s349 = ssub.s32 1024, 1024
      %350 = vsyncadd [#allocation4], %s349
      %s351 = sshll.u32 [#allocation7], 4
      %s352 = int_to_ptr.vmem [resolvable:$true] %s351
      %357 = dma.vmem_to_hbm [thread:$0]  %s352, 1024, %s2, [#allocation4], 64, 64, 4
    $region21: #{tpu_custom_call.1} parent=1 // pred_fallthru
      _
    // Predicated region
    $region22: #{tpu_custom_call.1} parent=1 // pred_check
      _
    $region23: #{tpu_custom_call.1} parent=1 // pred_check_branch
      %359 = sbr.rel (0) target = $region25
    $region24: #{tpu_custom_call.1} parent=1 // pred_region
      %360 = dma.done [#allocation4], 1024
    $region25: #{tpu_custom_call.1} parent=1 // pred_fallthru
      _
    %361 = vsyncpa [#allocation3], 1
    %362 = vsyncpa [#allocation6], 1
    %363 = vsyncpa [#allocation4], 1

</llo_original>
